<compile_context>
chip_gen: v6e
topology: v6e:2x2x1
jax: 0.10.0
libtpu: 0.0.40
codegen_flags: <defaults>
</compile_context>

<pallas_src>
import functools

import jax
import jax.numpy as jnp
from jax import lax
from jax.experimental import pallas as pl
from jax.experimental.pallas import tpu as pltpu


# ----------------------------- kernels -------------------------------------


def _gdn_kernel_small_c(gamma_ref, beta_ref, x_ref, o_ref, *, C, inverse):
    """Small-C path: dense spatial slabs, VPU channel mix, scalars in SMEM.

    gamma_ref: SMEM (C*C,)  flattened gamma_p (row-major: [c_in * C + c_out])
    beta_ref : SMEM (C,)
    x_ref/o_ref: VMEM (1, C, bs, 128)  -- per-channel (bs, 128) dense slabs.
    """
    # Squared input, one dense (bs, 128) slab per input channel.
    xsq = []
    for cin in range(C):                               # C is small & static
        xc = x_ref[0, cin, :, :].astype(jnp.float32)
        xsq.append(xc * xc)
    # Per-output-channel fused mix + rsqrt + mul, stored directly (no concat).
    for cout in range(C):
        y = beta_ref[cout] + gamma_ref[cout] * xsq[0]          # c_in = 0
        for cin in range(1, C):
            y = y + gamma_ref[cin * C + cout] * xsq[cin]
        scale = jnp.sqrt(y) if inverse else lax.rsqrt(y)
        xo = x_ref[0, cout, :, :].astype(jnp.float32)
        o_ref[0, cout, :, :] = (xo * scale).astype(o_ref.dtype)


def _gdn_kernel_mxu(gammaT_ref, beta_ref, x_ref, o_ref, *, inverse):
    """Large-C path: y = gamma_p^T @ x^2 on the MXU, lane-dense output.

    gammaT_ref: VMEM (C, C)  (= gamma_p.T, resident across the grid)
    beta_ref  : VMEM (C, 1)
    x_ref/o_ref: VMEM (1, C, ts)
    """
    x = x_ref[0].astype(jnp.float32)               # (C, ts)
    y = jnp.dot(gammaT_ref[...], x * x, preferred_element_type=jnp.float32)
    y = y + beta_ref[...]                          # (C,1) broadcast over lanes
    scale = jnp.sqrt(y) if inverse else lax.rsqrt(y)
    o_ref[0] = (x * scale).astype(o_ref.dtype)


# --------------------------- parameter glue ---------------------------------


def gdn_params(channels_in, dtype=jnp.float32):
    """Deterministic parameter init, matching the PyTorch __init__."""
    eps = 2.0 ** (-36)
    gamma = jnp.sqrt(jnp.eye(channels_in, dtype=dtype) * 0.1 + eps)
    beta = jnp.sqrt(jnp.ones((channels_in,), dtype=dtype) * 1.0 + eps)
    return gamma, beta


def _parametrize(gamma, beta, reparam_offset=2.0 ** (-18)):
    """lower_bound + square - pedestal, exactly as GDN.parametrize (fwd only)."""
    pedestal = reparam_offset ** 2
    beta_bound = (1e-6 + pedestal) ** 0.5
    gamma_bound = (0.0 + pedestal) ** 0.5
    beta_p = jnp.power(jnp.maximum(beta, beta_bound), 2) - pedestal
    gamma_p = jnp.power(jnp.maximum(gamma, gamma_bound), 2) - pedestal
    # TODO(synk): lower_bound's custom backward (gradient gating) is autograd-only
    # and not part of the forward pass, so it is not implemented here.
    return beta_p, gamma_p


# --------------------------- tiling heuristics -------------------------------


def _choose_lane_tile(HW, C, target_bytes, N, min_steps, itemsize):
    """Spatial lane tile for the (N, C, HW) MXU path; must divide HW."""
    if HW % 128 != 0:
        return HW                      # full-extent block: no padding round-trip
    S = HW // 128
    eff_min = min(min_steps, N * S)    # best achievable step count
    best = 128
    for m in range(1, S + 1):
        if S % m:
            continue
        ts = m * 128
        if C * ts * itemsize > target_bytes:
            continue
        if N * (S // m) < eff_min:
            continue                   # keep enough grid steps for pipelining
        best = max(best, ts)
    return best


def _choose_sublane_tile(S, C, target_bytes, N, min_steps, itemsize):
    """Sublane tile bs for block (1, C, bs, 128) on the (N, C, S, 128) view.

    bs must divide S and be a multiple of 8, or equal S (full-extent).
    """
    cands = sorted({S} | {b for b in range(8, S, 8) if S % b == 0})
    eff_min = min(min_steps, N * (S // cands[0]))
    best = cands[0]
    for bs in cands:
        if C * bs * 128 * itemsize > target_bytes:
            continue
        if N * (S // bs) < eff_min:
            continue
        best = max(best, bs)
    return best


def _vmem_limit_bytes(tile_bytes, param_vmem_bytes):
    """2x in + 2x out double buffers + double-buffered params + margin,
    clamped against the (generation-dependent) physical VMEM capacity."""
    try:
        cap = int(pltpu.get_tpu_info().vmem_capacity_bytes)
    except Exception:
        cap = 64 << 20  # conservative fallback: v7x per-TensorCore VMEM
    need = 4 * tile_bytes + 2 * param_vmem_bytes + (4 << 20)
    return int(max(8 << 20, min(need, (cap * 3) // 4)))


# ------------------------------ wrapper -------------------------------------


def gdn_forward(x_nchw, gamma, beta, inverse=False,
                target_tile_bytes=1 << 20, small_c_threshold=8,
                min_grid_steps=8):
    """x_nchw: (N, C, H, W).  Returns (N, C, H, W). No layout transposes,
    no HBM padding round-trips."""
    N, C, H, W = x_nchw.shape
    HW = H * W
    itemsize = jnp.dtype(x_nchw.dtype).itemsize

    beta_p, gamma_p = _parametrize(gamma, beta)
    gamma_p = gamma_p.astype(jnp.float32)
    beta_p = beta_p.astype(jnp.float32)

    # Small-C VPU path needs HW % 128 == 0 for the dense (sublane, lane) view;
    # otherwise (and for larger C) the MXU path handles any C / HW.
    use_vpu = (C <= small_c_threshold) and (HW % 128 == 0)

    if use_vpu:
        S = HW // 128
        bs = _choose_sublane_tile(S, C, target_tile_bytes, N,
                                  min_grid_steps, itemsize)
        x_in = x_nchw.reshape(N, C, S, 128)              # free contiguous view
        grid = (N, S // bs)
        x_spec = pl.BlockSpec((1, C, bs, 128), lambda n, s: (n, 0, s, 0))
        out_spec = pl.BlockSpec((1, C, bs, 128), lambda n, s: (n, 0, s, 0))
        kernel = functools.partial(_gdn_kernel_small_c, C=C, inverse=inverse)
        in_specs = [
            pl.BlockSpec(memory_space=pltpu.MemorySpace.SMEM),  # gamma (C*C,)
            pl.BlockSpec(memory_space=pltpu.MemorySpace.SMEM),  # beta  (C,)
            x_spec,
        ]
        params = (gamma_p.reshape(C * C), beta_p.reshape(C))
        out_shape = jax.ShapeDtypeStruct((N, C, S, 128), x_nchw.dtype)
        tile_bytes = C * bs * 128 * itemsize
        param_vmem = 0                                     # params live in SMEM
    else:
        ts = _choose_lane_tile(HW, C, target_tile_bytes, N,
                               min_grid_steps, itemsize)
        x_in = x_nchw.reshape(N, C, HW)                    # free contiguous view
        grid = (N, HW // ts)
        x_spec = pl.BlockSpec((1, C, ts), lambda n, s: (n, 0, s))
        out_spec = pl.BlockSpec((1, C, ts), lambda n, s: (n, 0, s))
        kernel = functools.partial(_gdn_kernel_mxu, inverse=inverse)
        in_specs = [
            pl.BlockSpec((C, C), lambda n, s: (0, 0)),  # gamma_p^T (resident)
            pl.BlockSpec((C, 1), lambda n, s: (0, 0)),  # beta_p column
            x_spec,
        ]
        params = (gamma_p.T, beta_p.reshape(C, 1))
        out_shape = jax.ShapeDtypeStruct((N, C, HW), x_nchw.dtype)
        tile_bytes = C * ts * itemsize
        param_vmem = (C * C + C) * 4

    vmem_limit = _vmem_limit_bytes(tile_bytes, param_vmem)

    out = pl.pallas_call(
        kernel,
        out_shape=out_shape,
        grid_spec=pltpu.PrefetchScalarGridSpec(
            num_scalar_prefetch=0,
            grid=grid,
            in_specs=in_specs,
            out_specs=out_spec,
        ),
        compiler_params=pltpu.CompilerParams(
            dimension_semantics=("parallel", "parallel"),
            vmem_limit_bytes=vmem_limit),
    )(*params, x_in)

    return out.reshape(N, C, H, W)


# ----------------------------- reference ------------------------------------


def gdn_reference(x_nchw, gamma, beta, inverse=False):
    """Pure-JAX reference mirroring the PyTorch forward, for validation."""
    beta_p, gamma_p = _parametrize(gamma, beta)
    y = jnp.tensordot(jnp.square(x_nchw), gamma_p, axes=[[1], [0]])  # (N,H,W,C)
    y = y + beta_p
    y = jnp.transpose(y, (0, 3, 1, 2))
    if inverse:
        return x_nchw * jnp.sqrt(y)
    return x_nchw * lax.rsqrt(y)


# -------------------------------- main --------------------------------------


if __name__ == "__main__":
    key = jax.random.PRNGKey(0)
    keys = jax.random.split(key, 8)

    # --- 1) small-C VPU path (C=4, 16x16), forward + inverse ---
    N, C, H, W = 2, 4, 16, 16
    x = jax.random.normal(keys[0], (N, C, H, W), dtype=jnp.float32)
    gamma, beta = gdn_params(C)
    gamma = gamma + 0.05 * jax.random.uniform(keys[1], (C, C), dtype=jnp.float32)
    out = jax.block_until_ready(gdn_forward(x, gamma, beta, inverse=False))
    ref = gdn_reference(x, gamma, beta, inverse=False)
    assert out.shape == (N, C, H, W)
    assert jnp.allclose(out, ref, atol=1e-5, rtol=1e-5), "fwd mismatch (C=4)"
    out_i = jax.block_until_ready(gdn_forward(x, gamma, beta, inverse=True))
    ref_i = gdn_reference(x, gamma, beta, inverse=True)
    assert jnp.allclose(out_i, ref_i, atol=1e-5, rtol=1e-5), "inv mismatch (C=4)"

    # --- 2) small-C path with dense (8,128) sublane slabs (C=8, 32x32) ---
    N, C, H, W = 2, 8, 32, 32
    x = jax.random.normal(keys[2], (N, C, H, W), dtype=jnp.float32)
    gamma, beta = gdn_params(C)
    gamma = gamma + 0.02 * jax.random.uniform(keys[3], (C, C), dtype=jnp.float32)
    out = jax.block_until_ready(gdn_forward(x, gamma, beta))
    ref = gdn_reference(x, gamma, beta)
    assert jnp.allclose(out, ref, atol=1e-5, rtol=1e-5), "fwd mismatch (C=8)"

    # --- 3) MXU path, HW not a multiple of 128 (full-extent spatial block) ---
    N, C, H, W = 2, 128, 8, 8
    x = jax.random.normal(keys[4], (N, C, H, W), dtype=jnp.float32)
    gamma, beta = gdn_params(C)
    gamma = gamma + 0.01 * jax.random.uniform(keys[5], (C, C), dtype=jnp.float32)
    out = jax.block_until_ready(gdn_forward(x, gamma, beta))
    ref = gdn_reference(x, gamma, beta)
    assert jnp.allclose(out, ref, atol=1e-4, rtol=1e-4), "fwd mismatch (C=128, HW=64)"

    # --- 4) MXU path, 128-divisible spatial -> multi-step lane tiling ---
    N, C, H, W = 1, 128, 16, 16
    x = jax.random.normal(keys[6], (N, C, H, W), dtype=jnp.float32)
    gamma, beta = gdn_params(C)
    gamma = gamma + 0.01 * jax.random.uniform(keys[7], (C, C), dtype=jnp.float32)
    out = jax.block_until_ready(gdn_forward(x, gamma, beta))
    ref = gdn_reference(x, gamma, beta)
    assert jnp.allclose(out, ref, atol=1e-4, rtol=1e-4), "fwd mismatch (C=128, HW=256)"

    print("KERNEL_OK")
</pallas_src>

<mosaic_0001>
module attributes {stable_mosaic.version = 11 : i64} {
  func.func @_gdn_kernel_small_c(%arg0: i32, %arg1: i32, %arg2: memref<16xf32, #tpu.memory_space<smem>>, %arg3: memref<4xf32, #tpu.memory_space<smem>>, %arg4: memref<1x4x2x128xf32, #tpu.memory_space<vmem>>, %arg5: memref<1x4x2x128xf32, #tpu.memory_space<vmem>>) attributes {dimension_semantics = [#tpu.dimension_semantics<parallel>, #tpu.dimension_semantics<parallel>], iteration_bounds = array<i64: 2, 1>, scalar_prefetch = 0 : i64, scratch_operands = 0 : i64, tpu.core_type = #tpu.core_type<tc>, window_params = [{transform_indices = @transform_0, window_bounds = array<i64: 16>}, {transform_indices = @transform_1, window_bounds = array<i64: 4>}, {transform_indices = @transform_2, window_bounds = array<i64: 1, 4, 2, 128>}, {transform_indices = @transform_3, window_bounds = array<i64: 1, 4, 2, 128>}]} {
    %c0 = arith.constant 0 : index
    %c0_0 = arith.constant 0 : index
    %c0_1 = arith.constant 0 : index
    %c0_2 = arith.constant 0 : index
    %0 = vector.load %arg4[%c0, %c0_0, %c0_1, %c0_2] : memref<1x4x2x128xf32, #tpu.memory_space<vmem>>, vector<1x1x2x128xf32>
    %1 = vector.shape_cast %0 : vector<1x1x2x128xf32> to vector<2x128xf32>
    %2 = arith.mulf %1, %1 : vector<2x128xf32>
    %c0_3 = arith.constant 0 : index
    %c1 = arith.constant 1 : index
    %c0_4 = arith.constant 0 : index
    %c0_5 = arith.constant 0 : index
    %3 = vector.load %arg4[%c0_3, %c1, %c0_4, %c0_5] : memref<1x4x2x128xf32, #tpu.memory_space<vmem>>, vector<1x1x2x128xf32>
    %4 = vector.shape_cast %3 : vector<1x1x2x128xf32> to vector<2x128xf32>
    %5 = arith.mulf %4, %4 : vector<2x128xf32>
    %c0_6 = arith.constant 0 : index
    %c2 = arith.constant 2 : index
    %c0_7 = arith.constant 0 : index
    %c0_8 = arith.constant 0 : index
    %6 = vector.load %arg4[%c0_6, %c2, %c0_7, %c0_8] : memref<1x4x2x128xf32, #tpu.memory_space<vmem>>, vector<1x1x2x128xf32>
    %7 = vector.shape_cast %6 : vector<1x1x2x128xf32> to vector<2x128xf32>
    %8 = arith.mulf %7, %7 : vector<2x128xf32>
    %c0_9 = arith.constant 0 : index
    %c3 = arith.constant 3 : index
    %c0_10 = arith.constant 0 : index
    %c0_11 = arith.constant 0 : index
    %9 = vector.load %arg4[%c0_9, %c3, %c0_10, %c0_11] : memref<1x4x2x128xf32, #tpu.memory_space<vmem>>, vector<1x1x2x128xf32>
    %10 = vector.shape_cast %9 : vector<1x1x2x128xf32> to vector<2x128xf32>
    %11 = arith.mulf %10, %10 : vector<2x128xf32>
    %c0_12 = arith.constant 0 : index
    %12 = memref.load %arg3[%c0_12] : memref<4xf32, #tpu.memory_space<smem>>
    %c0_13 = arith.constant 0 : index
    %13 = memref.load %arg2[%c0_13] : memref<16xf32, #tpu.memory_space<smem>>
    %14 = vector.broadcast %13 : f32 to vector<2x128xf32>
    %15 = arith.mulf %14, %2 : vector<2x128xf32>
    %16 = vector.broadcast %12 : f32 to vector<2x128xf32>
    %17 = arith.addf %16, %15 : vector<2x128xf32>
    %c4 = arith.constant 4 : index
    %18 = memref.load %arg2[%c4] : memref<16xf32, #tpu.memory_space<smem>>
    %19 = vector.broadcast %18 : f32 to vector<2x128xf32>
    %20 = arith.mulf %19, %5 : vector<2x128xf32>
    %21 = arith.addf %17, %20 : vector<2x128xf32>
    %c8 = arith.constant 8 : index
    %22 = memref.load %arg2[%c8] : memref<16xf32, #tpu.memory_space<smem>>
    %23 = vector.broadcast %22 : f32 to vector<2x128xf32>
    %24 = arith.mulf %23, %8 : vector<2x128xf32>
    %25 = arith.addf %21, %24 : vector<2x128xf32>
    %c12 = arith.constant 12 : index
    %26 = memref.load %arg2[%c12] : memref<16xf32, #tpu.memory_space<smem>>
    %27 = vector.broadcast %26 : f32 to vector<2x128xf32>
    %28 = arith.mulf %27, %11 : vector<2x128xf32>
    %29 = arith.addf %25, %28 : vector<2x128xf32>
    %30 = math.rsqrt %29 : vector<2x128xf32>
    %c0_14 = arith.constant 0 : index
    %c0_15 = arith.constant 0 : index
    %c0_16 = arith.constant 0 : index
    %c0_17 = arith.constant 0 : index
    %31 = vector.load %arg4[%c0_14, %c0_15, %c0_16, %c0_17] : memref<1x4x2x128xf32, #tpu.memory_space<vmem>>, vector<1x1x2x128xf32>
    %32 = vector.shape_cast %31 : vector<1x1x2x128xf32> to vector<2x128xf32>
    %33 = arith.mulf %32, %30 : vector<2x128xf32>
    %c0_18 = arith.constant 0 : index
    %c0_19 = arith.constant 0 : index
    %c0_20 = arith.constant 0 : index
    %c0_21 = arith.constant 0 : index
    %34 = vector.load %arg5[%c0_18, %c0_19, %c0_20, %c0_21] : memref<1x4x2x128xf32, #tpu.memory_space<vmem>>, vector<1x1x2x128xf32>
    %35 = vector.shape_cast %34 : vector<1x1x2x128xf32> to vector<2x128xf32>
    %36 = vector.shape_cast %33 : vector<2x128xf32> to vector<1x1x2x128xf32>
    tpu.vector_store %arg5[%c0_18, %c0_19, %c0_20, %c0_21], %36 {strides = array<i32>} : memref<1x4x2x128xf32, #tpu.memory_space<vmem>>, vector<1x1x2x128xf32>,
    %c1_22 = arith.constant 1 : index
    %37 = memref.load %arg3[%c1_22] : memref<4xf32, #tpu.memory_space<smem>>
    %c1_23 = arith.constant 1 : index
    %38 = memref.load %arg2[%c1_23] : memref<16xf32, #tpu.memory_space<smem>>
    %39 = vector.broadcast %38 : f32 to vector<2x128xf32>
    %40 = arith.mulf %39, %2 : vector<2x128xf32>
    %41 = vector.broadcast %37 : f32 to vector<2x128xf32>
    %42 = arith.addf %41, %40 : vector<2x128xf32>
    %c5 = arith.constant 5 : index
    %43 = memref.load %arg2[%c5] : memref<16xf32, #tpu.memory_space<smem>>
    %44 = vector.broadcast %43 : f32 to vector<2x128xf32>
    %45 = arith.mulf %44, %5 : vector<2x128xf32>
    %46 = arith.addf %42, %45 : vector<2x128xf32>
    %c9 = arith.constant 9 : index
    %47 = memref.load %arg2[%c9] : memref<16xf32, #tpu.memory_space<smem>>
    %48 = vector.broadcast %47 : f32 to vector<2x128xf32>
    %49 = arith.mulf %48, %8 : vector<2x128xf32>
    %50 = arith.addf %46, %49 : vector<2x128xf32>
    %c13 = arith.constant 13 : index
    %51 = memref.load %arg2[%c13] : memref<16xf32, #tpu.memory_space<smem>>
    %52 = vector.broadcast %51 : f32 to vector<2x128xf32>
    %53 = arith.mulf %52, %11 : vector<2x128xf32>
    %54 = arith.addf %50, %53 : vector<2x128xf32>
    %55 = math.rsqrt %54 : vector<2x128xf32>
    %c0_24 = arith.constant 0 : index
    %c1_25 = arith.constant 1 : index
    %c0_26 = arith.constant 0 : index
    %c0_27 = arith.constant 0 : index
    %56 = vector.load %arg4[%c0_24, %c1_25, %c0_26, %c0_27] : memref<1x4x2x128xf32, #tpu.memory_space<vmem>>, vector<1x1x2x128xf32>
    %57 = vector.shape_cast %56 : vector<1x1x2x128xf32> to vector<2x128xf32>
    %58 = arith.mulf %57, %55 : vector<2x128xf32>
    %c0_28 = arith.constant 0 : index
    %c1_29 = arith.constant 1 : index
    %c0_30 = arith.constant 0 : index
    %c0_31 = arith.constant 0 : index
    %59 = vector.load %arg5[%c0_28, %c1_29, %c0_30, %c0_31] : memref<1x4x2x128xf32, #tpu.memory_space<vmem>>, vector<1x1x2x128xf32>
    %60 = vector.shape_cast %59 : vector<1x1x2x128xf32> to vector<2x128xf32>
    %61 = vector.shape_cast %58 : vector<2x128xf32> to vector<1x1x2x128xf32>
    tpu.vector_store %arg5[%c0_28, %c1_29, %c0_30, %c0_31], %61 {strides = array<i32>} : memref<1x4x2x128xf32, #tpu.memory_space<vmem>>, vector<1x1x2x128xf32>,
    %c2_32 = arith.constant 2 : index
    %62 = memref.load %arg3[%c2_32] : memref<4xf32, #tpu.memory_space<smem>>
    %c2_33 = arith.constant 2 : index
    %63 = memref.load %arg2[%c2_33] : memref<16xf32, #tpu.memory_space<smem>>
    %64 = vector.broadcast %63 : f32 to vector<2x128xf32>
    %65 = arith.mulf %64, %2 : vector<2x128xf32>
    %66 = vector.broadcast %62 : f32 to vector<2x128xf32>
    %67 = arith.addf %66, %65 : vector<2x128xf32>
    %c6 = arith.constant 6 : index
    %68 = memref.load %arg2[%c6] : memref<16xf32, #tpu.memory_space<smem>>
    %69 = vector.broadcast %68 : f32 to vector<2x128xf32>
    %70 = arith.mulf %69, %5 : vector<2x128xf32>
    %71 = arith.addf %67, %70 : vector<2x128xf32>
    %c10 = arith.constant 10 : index
    %72 = memref.load %arg2[%c10] : memref<16xf32, #tpu.memory_space<smem>>
    %73 = vector.broadcast %72 : f32 to vector<2x128xf32>
    %74 = arith.mulf %73, %8 : vector<2x128xf32>
    %75 = arith.addf %71, %74 : vector<2x128xf32>
    %c14 = arith.constant 14 : index
    %76 = memref.load %arg2[%c14] : memref<16xf32, #tpu.memory_space<smem>>
    %77 = vector.broadcast %76 : f32 to vector<2x128xf32>
    %78 = arith.mulf %77, %11 : vector<2x128xf32>
    %79 = arith.addf %75, %78 : vector<2x128xf32>
    %80 = math.rsqrt %79 : vector<2x128xf32>
    %c0_34 = arith.constant 0 : index
    %c2_35 = arith.constant 2 : index
    %c0_36 = arith.constant 0 : index
    %c0_37 = arith.constant 0 : index
    %81 = vector.load %arg4[%c0_34, %c2_35, %c0_36, %c0_37] : memref<1x4x2x128xf32, #tpu.memory_space<vmem>>, vector<1x1x2x128xf32>
    %82 = vector.shape_cast %81 : vector<1x1x2x128xf32> to vector<2x128xf32>
    %83 = arith.mulf %82, %80 : vector<2x128xf32>
    %c0_38 = arith.constant 0 : index
    %c2_39 = arith.constant 2 : index
    %c0_40 = arith.constant 0 : index
    %c0_41 = arith.constant 0 : index
    %84 = vector.load %arg5[%c0_38, %c2_39, %c0_40, %c0_41] : memref<1x4x2x128xf32, #tpu.memory_space<vmem>>, vector<1x1x2x128xf32>
    %85 = vector.shape_cast %84 : vector<1x1x2x128xf32> to vector<2x128xf32>
    %86 = vector.shape_cast %83 : vector<2x128xf32> to vector<1x1x2x128xf32>
    tpu.vector_store %arg5[%c0_38, %c2_39, %c0_40, %c0_41], %86 {strides = array<i32>} : memref<1x4x2x128xf32, #tpu.memory_space<vmem>>, vector<1x1x2x128xf32>,
    %c3_42 = arith.constant 3 : index
    %87 = memref.load %arg3[%c3_42] : memref<4xf32, #tpu.memory_space<smem>>
    %c3_43 = arith.constant 3 : index
    %88 = memref.load %arg2[%c3_43] : memref<16xf32, #tpu.memory_space<smem>>
    %89 = vector.broadcast %88 : f32 to vector<2x128xf32>
    %90 = arith.mulf %89, %2 : vector<2x128xf32>
    %91 = vector.broadcast %87 : f32 to vector<2x128xf32>
    %92 = arith.addf %91, %90 : vector<2x128xf32>
    %c7 = arith.constant 7 : index
    %93 = memref.load %arg2[%c7] : memref<16xf32, #tpu.memory_space<smem>>
    %94 = vector.broadcast %93 : f32 to vector<2x128xf32>
    %95 = arith.mulf %94, %5 : vector<2x128xf32>
    %96 = arith.addf %92, %95 : vector<2x128xf32>
    %c11 = arith.constant 11 : index
    %97 = memref.load %arg2[%c11] : memref<16xf32, #tpu.memory_space<smem>>
    %98 = vector.broadcast %97 : f32 to vector<2x128xf32>
    %99 = arith.mulf %98, %8 : vector<2x128xf32>
    %100 = arith.addf %96, %99 : vector<2x128xf32>
    %c15 = arith.constant 15 : index
    %101 = memref.load %arg2[%c15] : memref<16xf32, #tpu.memory_space<smem>>
    %102 = vector.broadcast %101 : f32 to vector<2x128xf32>
    %103 = arith.mulf %102, %11 : vector<2x128xf32>
    %104 = arith.addf %100, %103 : vector<2x128xf32>
    %105 = math.rsqrt %104 : vector<2x128xf32>
    %c0_44 = arith.constant 0 : index
    %c3_45 = arith.constant 3 : index
    %c0_46 = arith.constant 0 : index
    %c0_47 = arith.constant 0 : index
    %106 = vector.load %arg4[%c0_44, %c3_45, %c0_46, %c0_47] : memref<1x4x2x128xf32, #tpu.memory_space<vmem>>, vector<1x1x2x128xf32>
    %107 = vector.shape_cast %106 : vector<1x1x2x128xf32> to vector<2x128xf32>
    %108 = arith.mulf %107, %105 : vector<2x128xf32>
    %c0_48 = arith.constant 0 : index
    %c3_49 = arith.constant 3 : index
    %c0_50 = arith.constant 0 : index
    %c0_51 = arith.constant 0 : index
    %109 = vector.load %arg5[%c0_48, %c3_49, %c0_50, %c0_51] : memref<1x4x2x128xf32, #tpu.memory_space<vmem>>, vector<1x1x2x128xf32>
    %110 = vector.shape_cast %109 : vector<1x1x2x128xf32> to vector<2x128xf32>
    %111 = vector.shape_cast %108 : vector<2x128xf32> to vector<1x1x2x128xf32>
    tpu.vector_store %arg5[%c0_48, %c3_49, %c0_50, %c0_51], %111 {strides = array<i32>} : memref<1x4x2x128xf32, #tpu.memory_space<vmem>>, vector<1x1x2x128xf32>,
    return
  }
  func.func @transform_0(%arg0: i32, %arg1: i32) -> i32 {
    %c0_i32 = arith.constant 0 : i32
    %c0_i32_0 = arith.constant 0 : i32
    return %c0_i32 : i32
  }
  func.func @transform_1(%arg0: i32, %arg1: i32) -> i32 {
    %c0_i32 = arith.constant 0 : i32
    %c0_i32_0 = arith.constant 0 : i32
    return %c0_i32 : i32
  }
  func.func @transform_2(%arg0: i32, %arg1: i32) -> (i32, i32, i32, i32) {
    %c0_i32 = arith.constant 0 : i32
    %c0_i32_0 = arith.constant 0 : i32
    %c0_i32_1 = arith.constant 0 : i32
    return %arg0, %c0_i32, %arg1, %c0_i32_0 : i32, i32, i32, i32
  }
  func.func @transform_3(%arg0: i32, %arg1: i32) -> (i32, i32, i32, i32) {
    %c0_i32 = arith.constant 0 : i32
    %c0_i32_0 = arith.constant 0 : i32
    %c0_i32_1 = arith.constant 0 : i32
    return %arg0, %c0_i32, %arg1, %c0_i32_0 : i32, i32, i32, i32
  }
}

</mosaic_0001>

<llo_original>
// kernel: tpu_custom_call.1
$region0: #{tpu_custom_call.1}
  #allocation0 [shape = 'u32[]', space=smem, size = 0x4, offset = 0x4, fixed_abs, tag = 'smem constant byte address 0x4 - core index']
  #allocation1 [shape = 'u32[144,128]{1,0:T(1,128)}', space=vmem, size = 0x12000, scoped, tag = 'internal scratch']
  %s0 = inlined_call_operand.hbm [shape: f32[16], index: 0, kind: input, shape index: {}]
  %s1 = inlined_call_operand.vmem [shape: f32[4], index: 1, kind: input, shape index: {}]
  %s2 = inlined_call_operand.hbm [shape: f32[2,4,2,128], index: 2, kind: input, shape index: {}]
  %s3 = inlined_call_operand.hbm [shape: f32[2,4,2,128], index: 3, kind: output, shape index: {}]
  %s4 = sld [smem:[#allocation0]]
  $region57: #{tpu_custom_call.1} parent=0
    _
  %s6 = ssub.s32 1, %s4
  %s7 = scalar_select 0, %s6, %s4
  $region1: #{tpu_custom_call.1} parent=0
    #allocation2 [shape = 'u8[512]{0}', space=smem, size = 0x200, scoped, tag = 'input window, operand 0, single buffered']
    #allocation3 [shape = 's32[2]{0}', space=sflag, size = 0x8, scoped, tag = 'scoped memory for tpu_custom_call.1']
    #allocation4 [shape = 's32[2]{0}', space=sflag, size = 0x8, scoped, tag = 'scoped memory for tpu_custom_call.1']
    #allocation5 [shape = 's32[2]{0}', space=sflag, size = 0x8, scoped, tag = 'scoped memory for tpu_custom_call.1']
    #allocation6 [shape = 's32[2]{0}', space=sflag, size = 0x8, scoped, tag = 'scoped memory for tpu_custom_call.1']
    #allocation7 [shape = 'u8[512]{0}', space=smem, size = 0x200, scoped, tag = 'input window, operand 1, single buffered']
    #allocation8 [shape = 'u8[8192]{0}', space=vmem, size = 0x2000, scoped, tag = 'input window, operand 2']
    #allocation9 [shape = 'u8[8192]{0}', space=vmem, size = 0x2000, scoped, tag = 'output window, operand 0']
    %8 = vsyncpa [#allocation5], 0
    %9 = vsyncpa [#allocation6], 0
    %10 = vsyncpa [#allocation3], 0
    %s11 = scalar_lea.sflag [#allocation3], 1
    %12 = vsyncpa %s11, 0
    %13 = vsyncpa [#allocation4], 0
    %s14 = scalar_lea.sflag [#allocation4], 1
    %15 = vsyncpa %s14, 0
    loop: start=0, step=1, limit=4
    $region2: #{tpu_custom_call.1} parent=1 // loop_pre_header
      _
    $region3: #{tpu_custom_call.1} parent=1 // loop_header
      %s17 = sphi 0, %s21
      %p18 = scmp.ge.s32.totalorder %s17, 4
      %s24 = sphi 0, %s36
      %s25 = sphi 0, %s32
      %s26 = sphi 0, %s24
      %s27 = sphi 0, %s25
      %s28 = sphi 0, %s26
      %s29 = sphi 0, %s27
      %s37 = sphi 0, %s37
      %s39 = sphi 0, %s37
      %s40 = sphi 0, %s39
      %s54 = sphi 0, %s40
      %s58 = sphi 0, %s58
      %s60 = sphi 0, %s58
      %s61 = sphi 0, %s60
      %s75 = sphi 0, %s61
      %s83 = sphi 0, %s85
      %s86 = sphi 0, %s83
      %s87 = sphi 0, %s86
      %s103 = sphi 0, %s87
      %s111 = sphi 0, %s113
      %s114 = sphi 0, %s111
      %s115 = sphi 0, %s114
      %s131 = sphi 0, %s115
    $region4: #{tpu_custom_call.1} parent=1 // loop_header_branch
      %20 = sbr.rel (%p18) target = $region8
    $region5: #{tpu_custom_call.1} parent=1 // loop_body
      %s22 = ssub.s32 %s17, 1
      %s23 = ssub.s32 %s17, 2
      %s30 = sadd.s32 1, %s25
      %p31 = scmp.ge.s32.totalorder %s30, 1
      %s32 = scalar_select %p31, 0, %s30
      %s33 = sadd.s32 1, %s24
      %s34 = scalar_select %p31, %s33, %s24
      %p35 = scmp.ge.s32.totalorder %s34, 2
      %s36 = scalar_select %p35, 0, %s34
      %s38 = sadd.s32 %s37, 1
      %p41 = scmp.eq.s32.totalorder %s17, 1
      %p42 = scmp.ne.s32.totalorder %s37, %s39
      %p43 = scmp.eq.s32.totalorder %s17, 0
      %p44 = por %p42, %p43
      %p45 = scmp.ne.s32.totalorder %s37, %s39
      %p46 = scmp.eq.s32.totalorder %s22, 1
      %p47 = por %p45, %p46
      %p48 = scmp.ne.s32.totalorder %s39, %s40
      %p49 = scmp.eq.s32.totalorder %s22, 0
      %p50 = por %p48, %p49
      %p51 = scmp.ne.s32.totalorder %s39, %s40
      %p52 = scmp.eq.s32.totalorder %s23, 1
      %p53 = por %p51, %p52
      %p55 = scmp.ne.s32.totalorder %s40, %s54
      %p56 = scmp.eq.s32.totalorder %s23, 0
      %p57 = por %p55, %p56
      %s59 = sadd.s32 %s58, 1
      %p62 = scmp.eq.s32.totalorder %s17, 1
      %p63 = scmp.ne.s32.totalorder %s58, %s60
      %p64 = scmp.eq.s32.totalorder %s17, 0
      %p65 = por %p63, %p64
      %p66 = scmp.ne.s32.totalorder %s58, %s60
      %p67 = scmp.eq.s32.totalorder %s22, 1
      %p68 = por %p66, %p67
      %p69 = scmp.ne.s32.totalorder %s60, %s61
      %p70 = scmp.eq.s32.totalorder %s22, 0
      %p71 = por %p69, %p70
      %p72 = scmp.ne.s32.totalorder %s60, %s61
      %p73 = scmp.eq.s32.totalorder %s23, 1
      %p74 = por %p72, %p73
      %p76 = scmp.ne.s32.totalorder %s61, %s75
      %p77 = scmp.eq.s32.totalorder %s23, 0
      %p78 = por %p76, %p77
      %s79 = ssub.s32 %s24, %s36
      %s80 = ssub.s32 %s25, %s32
      %s81 = sor.u32 %s79, %s80
      %p82 = scmp.eq.s32.totalorder %s81, 0
      %s84 = sadd.s32 %s83, 1
      %s85 = scalar_select %p82, %s83, %s84
      %p88 = pneg %p82
      %p89 = scmp.eq.s32.totalorder %s17, 1
      %p90 = por %p88, %p89
      %p91 = scmp.ne.s32.totalorder %s83, %s86
      %p92 = scmp.eq.s32.totalorder %s17, 0
      %p93 = por %p91, %p92
      %p94 = scmp.ne.s32.totalorder %s83, %s86
      %p95 = scmp.eq.s32.totalorder %s22, 1
      %p96 = por %p94, %p95
      %p97 = scmp.ne.s32.totalorder %s86, %s87
      %p98 = scmp.eq.s32.totalorder %s22, 0
      %p99 = por %p97, %p98
      %p100 = scmp.ne.s32.totalorder %s86, %s87
      %p101 = scmp.eq.s32.totalorder %s23, 1
      %p102 = por %p100, %p101
      %p104 = scmp.ne.s32.totalorder %s87, %s103
      %p105 = scmp.eq.s32.totalorder %s23, 0
      %p106 = por %p104, %p105
      %s107 = ssub.s32 %s24, %s36
      %s108 = ssub.s32 %s25, %s32
      %s109 = sor.u32 %s107, %s108
      %p110 = scmp.eq.s32.totalorder %s109, 0
      %s112 = sadd.s32 %s111, 1
      %s113 = scalar_select %p110, %s111, %s112
      %p116 = pneg %p110
      %p117 = scmp.eq.s32.totalorder %s17, 1
      %p118 = por %p116, %p117
      %p119 = scmp.ne.s32.totalorder %s111, %s114
      %p120 = scmp.eq.s32.totalorder %s17, 0
      %p121 = por %p119, %p120
      %p122 = scmp.ne.s32.totalorder %s111, %s114
      %p123 = scmp.eq.s32.totalorder %s22, 1
      %p124 = por %p122, %p123
      %p125 = scmp.ne.s32.totalorder %s114, %s115
      %p126 = scmp.eq.s32.totalorder %s22, 0
      %p127 = por %p125, %p126
      %p128 = scmp.ne.s32.totalorder %s114, %s115
      %p129 = scmp.eq.s32.totalorder %s23, 1
      %p130 = por %p128, %p129
      %p132 = scmp.ne.s32.totalorder %s115, %s131
      %p133 = scmp.eq.s32.totalorder %s23, 0
      %p134 = por %p132, %p133
      %p135 = scmp.le.s32.totalorder 1, %s17
      %p136 = scmp.lt.s32.totalorder %s17, 3
      %p137 = pnand %p135, %p136
      %p138 = pneg %p137
      // Predicated region
      $region9: #{tpu_custom_call.1} parent=5 // pred_check
        _
      $region10: #{tpu_custom_call.1} parent=5 // pred_check_branch
        %140 = sbr.rel (%p137) target = $region12
      $region11: #{tpu_custom_call.1} parent=5 // pred_region
        %s141 = ssub.s32 %s17, 1
        // Predicated region
        $region13: #{tpu_custom_call.1} parent=11 // pred_check
          %p142 = pneg %p50
        $region14: #{tpu_custom_call.1} parent=11 // pred_check_branch
          %144 = sbr.rel (%p142) target = $region16
        $region15: #{tpu_custom_call.1} parent=11 // pred_region
          %s146 = ssub.s32 16, 16
          %147 = vsyncadd [#allocation5], %s146
          %150 = dma.hbm_to_smem %s0, 16, [#allocation2], [#allocation5]
        $region16: #{tpu_custom_call.1} parent=11 // pred_fallthru
          _
        // Predicated region
        $region17: #{tpu_custom_call.1} parent=11 // pred_check
          %p151 = pneg %p71
        $region18: #{tpu_custom_call.1} parent=11 // pred_check_branch
          %153 = sbr.rel (%p151) target = $region20
        $region19: #{tpu_custom_call.1} parent=11 // pred_region
          %s155 = ssub.s32 16, 16
          %156 = vsyncadd [#allocation6], %s155
          %s158 = sshll.u32 %s1, 4
          %s159 = int_to_ptr.vmem [resolvable:$true] %s158
          %161 = dma.vmem_to_smem %s159, 16, [#allocation7], [#allocation6]
        $region20: #{tpu_custom_call.1} parent=11 // pred_fallthru
          _
      $region12: #{tpu_custom_call.1} parent=5 // pred_fallthru
        _
      %p162 = scmp.lt.s32.totalorder %s17, 2
      // Predicated region
      $region21: #{tpu_custom_call.1} parent=5 // pred_check
        %p163 = pneg %p162
      $region22: #{tpu_custom_call.1} parent=5 // pred_check_branch
        %165 = sbr.rel (%p163) target = $region24
      $region23: #{tpu_custom_call.1} parent=5 // pred_region
        // Predicated region
        $region25: #{tpu_custom_call.1} parent=23 // pred_check
          %p166 = pneg %p93
        $region26: #{tpu_custom_call.1} parent=23 // pred_check_branch
          %168 = sbr.rel (%p166) target = $region28
        $region27: #{tpu_custom_call.1} parent=23 // pred_region
          %s169 = sand.u32 %s83, 1
          %s170 = scalar_lea.sflag [#allocation3], %s169
          %s171 = sand.u32 %s83, 1
          %s172 = smul.addr %s171, 8
          %s173 = scalar_lea.vmem [#allocation8], %s172
          %s175 = ssub.s32 128, 128
          %176 = vsyncadd %s170, %s175
          %s177 = smul.addr %s24, 4
          %s178 = sadd.s32 %s25, %s177
          %s179 = smul.addr %s178, 32
          %s180 = scalar_lea.hbm %s2, %s179
          %s181 = sshll.u32 %s173, 4
          %s182 = int_to_ptr.vmem [resolvable:$true] %s181
          %187 = dma.hbm_to_vmem [thread:$0]  %s180, 128, %s182, %s170, 32, 32, 2
        $region28: #{tpu_custom_call.1} parent=23 // pred_fallthru
          _
      $region24: #{tpu_custom_call.1} parent=5 // pred_fallthru
        _
      %p188 = scmp.le.s32.totalorder 1, %s17
      %p189 = scmp.lt.s32.totalorder %s17, 3
      %p190 = pnand %p188, %p189
      %p191 = pneg %p190
      // Predicated region
      $region29: #{tpu_custom_call.1} parent=5 // pred_check
        _
      $region30: #{tpu_custom_call.1} parent=5 // pred_check_branch
        %193 = sbr.rel (%p190) target = $region32
      $region31: #{tpu_custom_call.1} parent=5 // pred_region
        %s194 = ssub.s32 %s17, 1
        // Predicated region
        $region33: #{tpu_custom_call.1} parent=31 // pred_check
          %p195 = pneg %p50
        $region34: #{tpu_custom_call.1} parent=31 // pred_check_branch
          %197 = sbr.rel (%p195) target = $region36
        $region35: #{tpu_custom_call.1} parent=31 // pred_region
          %198 = dma.done [#allocation5], 16
        $region36: #{tpu_custom_call.1} parent=31 // pred_fallthru
          _
        // Predicated region
        $region37: #{tpu_custom_call.1} parent=31 // pred_check
          %p199 = pneg %p71
        $region38: #{tpu_custom_call.1} parent=31 // pred_check_branch
          %201 = sbr.rel (%p199) target = $region40
        $region39: #{tpu_custom_call.1} parent=31 // pred_region
          %202 = dma.done [#allocation6], 16
        $region40: #{tpu_custom_call.1} parent=31 // pred_fallthru
          _
        %s203 = sand.u32 %s86, 1
        %s204 = scalar_lea.sflag [#allocation3], %s203
        %s205 = sand.u32 %s86, 1
        %s206 = smul.addr %s205, 8
        %s207 = scalar_lea.vmem [#allocation8], %s206
        // Predicated region
        $region41: #{tpu_custom_call.1} parent=31 // pred_check
          %p208 = pneg %p99
        $region42: #{tpu_custom_call.1} parent=31 // pred_check_branch
          %210 = sbr.rel (%p208) target = $region44
        $region43: #{tpu_custom_call.1} parent=31 // pred_region
          %211 = dma.done %s204, 128
        $region44: #{tpu_custom_call.1} parent=31 // pred_fallthru
          _
        %212 = sfence
        %p213 = pneg %p50
        %p214 = pneg %p47
        %p215 = pneg %p71
        %p216 = pneg %p68
        %s217 = sand.u32 %s86, 1
        %s218 = scalar_lea.sflag [#allocation3], %s217
        %s219 = sand.u32 %s86, 1
        %s220 = smul.addr %s219, 8
        %s221 = scalar_lea.vmem [#allocation8], %s220
        %p222 = pneg %p99
        %p223 = pneg %p96
        %p224 = pneg %p127
        %p225 = pneg %p124
        %s226 = sand.u32 %s114, 1
        %s227 = scalar_lea.sflag [#allocation4], %s226
        %s228 = sand.u32 %s114, 1
        %s229 = smul.addr %s228, 8
        %s230 = scalar_lea.vmem [#allocation9], %s229
        %v231 = vld [vmem:[%s207] sm:$0x3]
        %v232 = vmul.f32 %v231, %v231
        %s233 = scalar_lea.vmem %s207, 2 [#allocation8]
        %v234 = vld [vmem:[%s233] sm:$0x3]
        %v235 = vmul.f32 %v234, %v234
        %s236 = scalar_lea.vmem %s207, 4 [#allocation8]
        %v237 = vld [vmem:[%s236] sm:$0x3]
        %v238 = vmul.f32 %v237, %v237
        %s239 = scalar_lea.vmem %s207, 6 [#allocation8]
        %v240 = vld [vmem:[%s239] sm:$0x3]
        %v241 = vmul.f32 %v240, %v240
        %s242 = sld [smem:[#allocation7]]
        %s243 = sld [smem:[#allocation2]]
        %v244 = vstv %s243
        %v245 = vmul.f32 %v244, %v232
        %v246 = vstv %s242
        %v247 = vadd.f32 %v246, %v245
        %s248 = sld [smem:[#allocation2 + $0x4]]
        %v249 = vstv %s248
        %v250 = vmul.f32 %v249, %v235
        %v251 = vadd.f32 %v247, %v250
        %s252 = sld [smem:[#allocation2 + $0x8]]
        %v253 = vstv %s252
        %v254 = vmul.f32 %v253, %v238
        %v255 = vadd.f32 %v251, %v254
        %s256 = sld [smem:[#allocation2 + $0xc]]
        %v257 = vstv %s256
        %v258 = vmul.f32 %v257, %v241
        %v259 = vadd.f32 %v255, %v258
        %v260 = vrsqrt.pop %v259
        %v261 = vmul.f32 %v231, %v260
        %262 = vst [vmem:[%s230] sm:$0x3] %v261
        %s263 = sld [smem:[#allocation7 + $0x1]]
        %s264 = sld [smem:[#allocation2 + $0x1]]
        %v265 = vstv %s264
        %v266 = vmul.f32 %v265, %v232
        %v267 = vstv %s263
        %v268 = vadd.f32 %v267, %v266
        %s269 = sld [smem:[#allocation2 + $0x5]]
        %v270 = vstv %s269
        %v271 = vmul.f32 %v270, %v235
        %v272 = vadd.f32 %v268, %v271
        %s273 = sld [smem:[#allocation2 + $0x9]]
        %v274 = vstv %s273
        %v275 = vmul.f32 %v274, %v238
        %v276 = vadd.f32 %v272, %v275
        %s277 = sld [smem:[#allocation2 + $0xd]]
        %v278 = vstv %s277
        %v279 = vmul.f32 %v278, %v241
        %v280 = vadd.f32 %v276, %v279
        %v281 = vrsqrt.pop %v280
        %v282 = vld [vmem:[%s233] sm:$0x3]
        %v283 = vmul.f32 %v282, %v281
        %s284 = scalar_lea.vmem %s230, 2 [#allocation9]
        %285 = vst [vmem:[%s284] sm:$0x3] %v283
        %s286 = sld [smem:[#allocation7 + $0x2]]
        %s287 = sld [smem:[#allocation2 + $0x2]]
        %v288 = vstv %s287
        %v289 = vmul.f32 %v288, %v232
        %v290 = vstv %s286
        %v291 = vadd.f32 %v290, %v289
        %s292 = sld [smem:[#allocation2 + $0x6]]
        %v293 = vstv %s292
        %v294 = vmul.f32 %v293, %v235
        %v295 = vadd.f32 %v291, %v294
        %s296 = sld [smem:[#allocation2 + $0xa]]
        %v297 = vstv %s296
        %v298 = vmul.f32 %v297, %v238
        %v299 = vadd.f32 %v295, %v298
        %s300 = sld [smem:[#allocation2 + $0xe]]
        %v301 = vstv %s300
        %v302 = vmul.f32 %v301, %v241
        %v303 = vadd.f32 %v299, %v302
        %v304 = vrsqrt.pop %v303
        %v305 = vld [vmem:[%s236] sm:$0x3]
        %v306 = vmul.f32 %v305, %v304
        %s307 = scalar_lea.vmem %s230, 4 [#allocation9]
        %308 = vst [vmem:[%s307] sm:$0x3] %v306
        %s309 = sld [smem:[#allocation7 + $0x3]]
        %s310 = sld [smem:[#allocation2 + $0x3]]
        %v311 = vstv %s310
        %v312 = vmul.f32 %v311, %v232
        %v313 = vstv %s309
        %v314 = vadd.f32 %v313, %v312
        %s315 = sld [smem:[#allocation2 + $0x7]]
        %v316 = vstv %s315
        %v317 = vmul.f32 %v316, %v235
        %v318 = vadd.f32 %v314, %v317
        %s319 = sld [smem:[#allocation2 + $0xb]]
        %v320 = vstv %s319
        %v321 = vmul.f32 %v320, %v238
        %v322 = vadd.f32 %v318, %v321
        %s323 = sld [smem:[#allocation2 + $0xf]]
        %v324 = vstv %s323
        %v325 = vmul.f32 %v324, %v241
        %v326 = vadd.f32 %v322, %v325
        %v327 = vrsqrt.pop %v326
        %v328 = vld [vmem:[%s239] sm:$0x3]
        %v329 = vmul.f32 %v328, %v327
        %s330 = scalar_lea.vmem %s230, 6 [#allocation9]
        %331 = vst [vmem:[%s330] sm:$0x3] %v329
        %s332 = sand.u32 %s114, 1
        %s333 = scalar_lea.sflag [#allocation4], %s332
        %s334 = sand.u32 %s114, 1
        %s335 = smul.addr %s334, 8
        %s336 = scalar_lea.vmem [#allocation9], %s335
        // Predicated region
        $region45: #{tpu_custom_call.1} parent=31 // pred_check
          %p337 = pneg %p124
        $region46: #{tpu_custom_call.1} parent=31 // pred_check_branch
          %339 = sbr.rel (%p337) target = $region48
        $region47: #{tpu_custom_call.1} parent=31 // pred_region
          %s341 = ssub.s32 128, 128
          %342 = vsyncadd %s333, %s341
          %s343 = smul.addr %s26, 4
          %s344 = sadd.s32 %s27, %s343
          %s345 = smul.addr %s344, 32
          %s346 = scalar_lea.hbm %s3, %s345
          %s347 = sshll.u32 %s336, 4
          %s348 = int_to_ptr.vmem [resolvable:$true] %s347
          %353 = dma.vmem_to_hbm [thread:$0]  %s348, 128, %s346, %s333, 32, 32, 2
        $region48: #{tpu_custom_call.1} parent=31 // pred_fallthru
          _
      $region32: #{tpu_custom_call.1} parent=5 // pred_fallthru
        _
      %p354 = scmp.le.s32.totalorder 2, %s17
      // Predicated region
      $region49: #{tpu_custom_call.1} parent=5 // pred_check
        %p355 = pneg %p354
      $region50: #{tpu_custom_call.1} parent=5 // pred_check_branch
        %357 = sbr.rel (%p355) target = $region52
      $region51: #{tpu_custom_call.1} parent=5 // pred_region
        %s358 = ssub.s32 %s17, 2
        // Predicated region
        $region53: #{tpu_custom_call.1} parent=51 // pred_check
          %p359 = pneg %p130
        $region54: #{tpu_custom_call.1} parent=51 // pred_check_branch
          %361 = sbr.rel (%p359) target = $region56
        $region55: #{tpu_custom_call.1} parent=51 // pred_region
          %s362 = sand.u32 %s115, 1
          %s363 = scalar_lea.sflag [#allocation4], %s362
          %s364 = sand.u32 %s115, 1
          %s365 = smul.addr %s364, 8
          %s366 = scalar_lea.vmem [#allocation9], %s365
          %367 = dma.done %s363, 128
        $region56: #{tpu_custom_call.1} parent=51 // pred_fallthru
          _
      $region52: #{tpu_custom_call.1} parent=5 // pred_fallthru
        _
    $region6: #{tpu_custom_call.1} parent=1 // loop_footer
      %s21 = sadd.s32 1, %s17
    $region7: #{tpu_custom_call.1} parent=1 // loop_footer_branch
      %16 = sbr.rel target = $region3
    $region8: #{tpu_custom_call.1} parent=1 // loop_exit
      _
    %368 = vsyncpa [#allocation3], 1
    %s369 = scalar_lea.sflag [#allocation3], 1
    %370 = vsyncpa %s369, 1
    %371 = vsyncpa [#allocation4], 1
    %s372 = scalar_lea.sflag [#allocation4], 1
    %373 = vsyncpa %s372, 1
    %374 = vsyncpa [#allocation5], 1
    %s375 = scalar_lea.sflag [#allocation5], 1
    %376 = vsyncpa %s375, 1
    %377 = vsyncpa [#allocation6], 1
    %s378 = scalar_lea.sflag [#allocation6], 1
    %379 = vsyncpa %s378, 1

</llo_original>
